<compile_context>
chip_gen: v5e
topology: v5e:2x2
jax: 0.10.0
libtpu: 0.0.40
codegen_flags: <defaults>
</compile_context>

<pallas_src>
import math

import jax
import jax.numpy as jnp
from jax.experimental import pallas as pl
from jax.experimental.pallas import tpu as pltpu


def get_basic_node_amount(modal):
    # synthetic stand-in for the project helper (number of nodes per modality)
    return {'E': 16, 'A': 12, 'E-A': 28}[modal]


def multi_modal_attention(x, w_modal, b_modal, w_eca, *, node_e):
    """Fused MultiModalAttention forward.

    x       : (B, C, N, D)  original layout (N = node axis, must equal node_modal)
    w_modal : (2, N)        Conv1d(N, 2, kernel_size=1) weight (kernel dim squeezed)
    b_modal : (2,)          Conv1d(N, 2, kernel_size=1) bias
    w_eca   : (3,)          Conv1d(1, 1, 3, padding='same', bias=False) weight (squeezed)
    node_e  : int           number of 'E' nodes (first block of the node axis)
    """
    B, C, N, D = x.shape
    ND = N * D
    x_dtype = x.dtype
    inv_cd = 1.0 / float(C * D)

    # ---- host-side weight-only prep (tiny, O(N*D*N); in a real model this is done once at init).
    # Fold "per-node mean -> {3-tap ECA conv, 1x1 modal conv}" into one (ND, N+2) operator applied
    # to the channel-summed, lane-flattened x, and "per-node activations -> per-lane scale" into
    # one 0/1 (N+2, ND) operator.  The per-element work on x stays inside the kernel.
    node_of_lane = jnp.arange(ND, dtype=jnp.int32) // D                  # node index of each lane
    n_idx = jnp.arange(N, dtype=jnp.int32)
    rel = n_idx[None, :] - node_of_lane[:, None]                          # (ND, N): n - node(l)
    w_eca_f = w_eca.astype(jnp.float32)
    # conv[n] = w0*pooled[n-1] + w1*pooled[n] + w2*pooled[n+1]  (zero-padded 'same')
    w_conv = inv_cd * (jnp.where(rel == 1, w_eca_f[0], 0.0)
                       + jnp.where(rel == 0, w_eca_f[1], 0.0)
                       + jnp.where(rel == -1, w_eca_f[2], 0.0))           # (ND, N)
    w_mod = inv_cd * w_modal.astype(jnp.float32).T[node_of_lane, :]       # (ND, 2)
    w_in = jnp.concatenate([w_conv, w_mod], axis=1)                       # (ND, N+2)
    bias_row = jnp.concatenate(
        [jnp.zeros((N,), jnp.float32), b_modal.astype(jnp.float32)])[None, :]   # (1, N+2)
    rows_eca = (node_of_lane[None, :] == n_idx[:, None]).astype(jnp.float32)    # (N, ND)
    row_s0 = (node_of_lane < node_e).astype(jnp.float32)[None, :]               # (1, ND)
    row_s1 = (node_of_lane >= node_e).astype(jnp.float32)[None, :]              # (1, ND)
    w_out = jnp.concatenate([rows_eca, row_s0, row_s1], axis=0)                 # (N+2, ND)

    # Free reshape of the contiguous array: fold (N, D) onto the lane axis.
    xf = x.reshape(B, C, ND)

    def kernel(x_ref, w_in_ref, b_ref, w_out_ref, o_ref):
        # channel sums with f32 accumulation:  xs[b, l] = sum_c x[b, c, l],  l = n*D + d
        xs = jnp.sum(x_ref[...].astype(jnp.float32), axis=1)              # (B, ND)
        # one MXU pass: [ECA conv logits over node means | modal 1x1 logits]
        logits = jnp.dot(xs, w_in_ref[...],
                         preferred_element_type=jnp.float32) + b_ref[...]  # (B, N+2)
        act = jax.nn.sigmoid(logits)                                       # [eca_0..eca_{N-1}, s0, s1]
        # one MXU pass: expand per-node activations to the per-lane scale
        #   scale[b, l] = eca[b, node(l)] + (s0 if node(l) < node_e else s1)
        scale = jnp.dot(act, w_out_ref[...],
                        preferred_element_type=jnp.float32)                # (B, ND)
        # broadcast-multiply in the input dtype; lane-dense store
        o_ref[...] = (x_ref[...] * scale[:, None, :].astype(x_dtype)).astype(o_ref.dtype)

    out_flat = pl.pallas_call(
        kernel,
        out_shape=jax.ShapeDtypeStruct((B, C, ND), x_dtype),
        in_specs=[
            pl.BlockSpec(memory_space=pltpu.MemorySpace.VMEM),   # x, lane-dense view
            pl.BlockSpec(memory_space=pltpu.MemorySpace.VMEM),   # W_in  (ND, N+2)
            pl.BlockSpec(memory_space=pltpu.MemorySpace.VMEM),   # bias  (1, N+2)
            pl.BlockSpec(memory_space=pltpu.MemorySpace.VMEM),   # W_out (N+2, ND)
        ],
        out_specs=pl.BlockSpec(memory_space=pltpu.MemorySpace.VMEM),
    )(xf, w_in, bias_row, w_out)

    return out_flat.reshape(B, C, N, D)


def reference(x, w_modal, b_modal, w_eca, node_e):
    # pure-JAX reproduction of the PyTorch forward (permute -> modal + ECA -> permute back)
    B, C, N, D = x.shape
    pooled = jnp.mean(x, axis=(1, 3))                                  # (B, N)
    logits = pooled @ w_modal.T + b_modal[None, :]                     # (B, 2)
    s = jax.nn.sigmoid(logits)
    node_idx = jnp.arange(N)[None, :]
    modal = jnp.where(node_idx < node_e, s[:, 0:1], s[:, 1:2])         # (B, N)
    pad = jnp.pad(pooled, ((0, 0), (1, 1)))
    conv = w_eca[0] * pad[:, :-2] + w_eca[1] * pad[:, 1:-1] + w_eca[2] * pad[:, 2:]
    eca = jax.nn.sigmoid(conv)                                         # (B, N)
    scale = modal + eca
    return x * scale[:, None, :, None]


if __name__ == "__main__":
    modal = 'E-A'
    node_modal = get_basic_node_amount(modal)        # 28 nodes total (E + A)
    node_e = get_basic_node_amount('E')              # first 16 nodes are the 'E' modality

    # ECA kernel size implied by ChannelAttention(channel=node_modal, gamma=2, b=1)
    gamma, b_ = 2, 1
    t = int(abs((math.log(node_modal, 2) + b_) / gamma))
    k = t if t % 2 else t + 1
    k_size = max(3, k)
    assert k_size == 3, "kernel above hardcodes the ECA kernel size of 3"

    B, C, N, D = 2, 4, node_modal, 16                # x: (batch, feat, node, dim) = (2, 4, 28, 16)
    key = jax.random.PRNGKey(0)
    kx, kw1, kb1, kw3 = jax.random.split(key, 4)
    x = jax.random.normal(kx, (B, C, N, D), dtype=jnp.float32)

    # Conv1d(node_modal, 2, kernel_size=1) params (deterministic PyTorch-style uniform init)
    bound1 = 1.0 / math.sqrt(node_modal * 1)
    w_modal = jax.random.uniform(kw1, (2, node_modal), dtype=jnp.float32,
                                 minval=-bound1, maxval=bound1)
    b_modal = jax.random.uniform(kb1, (2,), dtype=jnp.float32,
                                 minval=-bound1, maxval=bound1)
    # Conv1d(1, 1, 3, padding='same', bias=False) weight, flattened
    bound3 = 1.0 / math.sqrt(1 * k_size)
    w_eca = jax.random.uniform(kw3, (k_size,), dtype=jnp.float32,
                               minval=-bound3, maxval=bound3)

    out = multi_modal_attention(x, w_modal, b_modal, w_eca, node_e=node_e)
    out = jax.block_until_ready(out)

    ref = reference(x, w_modal, b_modal, w_eca, node_e)
    assert out.shape == x.shape
    assert jnp.allclose(out, ref, atol=1e-5, rtol=1e-5)
    print("KERNEL_OK")
</pallas_src>

<mosaic_0001>
module attributes {stable_mosaic.version = 11 : i64} {
  func.func @kernel(%arg0: memref<2x4x448xf32, #tpu.memory_space<vmem>>, %arg1: memref<448x30xf32, #tpu.memory_space<vmem>>, %arg2: memref<1x30xf32, #tpu.memory_space<vmem>>, %arg3: memref<30x448xf32, #tpu.memory_space<vmem>>, %arg4: memref<2x4x448xf32, #tpu.memory_space<vmem>>) attributes {dimension_semantics = [], scalar_prefetch = 0 : i64, scratch_operands = 0 : i64, tpu.core_type = #tpu.core_type<tc>} {
    %c0 = arith.constant 0 : index
    %c0_0 = arith.constant 0 : index
    %c0_1 = arith.constant 0 : index
    %0 = vector.load %arg0[%c0, %c0_0, %c0_1] : memref<2x4x448xf32, #tpu.memory_space<vmem>>, vector<2x4x448xf32>
    %cst = arith.constant dense<0.000000e+00> : vector<2x448xf32>
    %1 = vector.multi_reduction <add>, %0, %cst [1] : vector<2x4x448xf32> to vector<2x448xf32>
    %c0_2 = arith.constant 0 : index
    %c0_3 = arith.constant 0 : index
    %2 = vector.load %arg1[%c0_2, %c0_3] : memref<448x30xf32, #tpu.memory_space<vmem>>, vector<448x30xf32>
    %cst_4 = arith.constant dense<0.000000e+00> : vector<2x30xf32>
    %3 = tpu.matmul %1, %2, %cst_4 {dimension_numbers = #tpu.dot_dimension_numbers<[1], [0], [0], [1], [0, 0, 1, 1], [], []>} : vector<2x448xf32>, vector<448x30xf32>, vector<2x30xf32> -> vector<2x30xf32>
    %c0_5 = arith.constant 0 : index
    %c0_6 = arith.constant 0 : index
    %4 = vector.load %arg2[%c0_5, %c0_6] : memref<1x30xf32, #tpu.memory_space<vmem>>, vector<1x30xf32>
    %5 = vector.broadcast %4 : vector<1x30xf32> to vector<2x30xf32>
    %6 = arith.addf %3, %5 : vector<2x30xf32>
    %7 = arith.negf %6 : vector<2x30xf32>
    %8 = math.exp %7 : vector<2x30xf32>
    %cst_7 = arith.constant 1.000000e+00 : f32
    %9 = vector.broadcast %cst_7 : f32 to vector<2x30xf32>
    %10 = arith.addf %9, %8 : vector<2x30xf32>
    %11 = arith.divf %9, %10 : vector<2x30xf32>
    %c0_8 = arith.constant 0 : index
    %c0_9 = arith.constant 0 : index
    %12 = vector.load %arg3[%c0_8, %c0_9] : memref<30x448xf32, #tpu.memory_space<vmem>>, vector<30x448xf32>
    %cst_10 = arith.constant dense<0.000000e+00> : vector<2x448xf32>
    %13 = tpu.matmul %11, %12, %cst_10 {dimension_numbers = #tpu.dot_dimension_numbers<[1], [0], [0], [1], [0, 0, 1, 1], [], []>} : vector<2x30xf32>, vector<30x448xf32>, vector<2x448xf32> -> vector<2x448xf32>
    %c0_11 = arith.constant 0 : index
    %c0_12 = arith.constant 0 : index
    %c0_13 = arith.constant 0 : index
    %14 = vector.load %arg0[%c0_11, %c0_12, %c0_13] : memref<2x4x448xf32, #tpu.memory_space<vmem>>, vector<2x4x448xf32>
    %15 = vector.shape_cast %13 : vector<2x448xf32> to vector<2x1x448xf32>
    %16 = vector.broadcast %15 : vector<2x1x448xf32> to vector<2x4x448xf32>
    %17 = arith.mulf %14, %16 : vector<2x4x448xf32>
    %c0_14 = arith.constant 0 : index
    %c0_15 = arith.constant 0 : index
    %c0_16 = arith.constant 0 : index
    %18 = vector.load %arg4[%c0_14, %c0_15, %c0_16] : memref<2x4x448xf32, #tpu.memory_space<vmem>>, vector<2x4x448xf32>
    tpu.vector_store %arg4[%c0_14, %c0_15, %c0_16], %17 {strides = array<i32>} : memref<2x4x448xf32, #tpu.memory_space<vmem>>, vector<2x4x448xf32>,
    return
  }
}

</mosaic_0001>

<llo_original>
// kernel: tpu_custom_call.1
$region0: #{tpu_custom_call.1}
  #allocation0 [shape = 'u32[]', space=smem, size = 0x4, offset = 0x4, fixed_abs, tag = 'smem constant byte address 0x4 - core index']
  #allocation1 [shape = 'u32[72,128]{1,0:T(1,128)}', space=vmem, size = 0x9000, scoped, tag = 'internal scratch']
  %s0 = inlined_call_operand.vmem [shape: f32[2,4,448], index: 0, kind: input, shape index: {}]
  %s1 = inlined_call_operand.vmem [shape: f32[448,30], index: 1, kind: input, shape index: {}]
  %s2 = inlined_call_operand.vmem [shape: f32[1,30], index: 2, kind: input, shape index: {}]
  %s3 = inlined_call_operand.vmem [shape: f32[30,448], index: 3, kind: input, shape index: {}]
  %s4 = inlined_call_operand.hbm [shape: f32[2,4,448], index: 4, kind: output, shape index: {}]
  %s5 = sld [smem:[#allocation0]]
  $region26: #{tpu_custom_call.1} parent=0
    _
  %s7 = ssub.s32 1, %s5
  %s8 = scalar_select 0, %s7, %s5
  $region1: #{tpu_custom_call.1} parent=0
    #allocation2 [shape = 'u8[16384]{0}', space=vmem, size = 0x4000, scoped, tag = 'output window, operand 0, single buffered']
    #allocation3 [shape = 's32[1]{0}', space=sflag, size = 0x4, scoped, tag = 'scoped memory for tpu_custom_call.1']
    %9 = vsyncpa [#allocation3], 0
    // Predicated region
    $region2: #{tpu_custom_call.1} parent=1 // pred_check
      _
    $region3: #{tpu_custom_call.1} parent=1 // pred_check_branch
      %11 = sbr.rel (0) target = $region5
    $region4: #{tpu_custom_call.1} parent=1 // pred_region
      _
    $region5: #{tpu_custom_call.1} parent=1 // pred_fallthru
      _
    // Predicated region
    $region6: #{tpu_custom_call.1} parent=1 // pred_check
      _
    $region7: #{tpu_custom_call.1} parent=1 // pred_check_branch
      %13 = sbr.rel (0) target = $region9
    $region8: #{tpu_custom_call.1} parent=1 // pred_region
      _
    $region9: #{tpu_custom_call.1} parent=1 // pred_fallthru
      _
    // Predicated region
    $region10: #{tpu_custom_call.1} parent=1 // pred_check
      _
    $region11: #{tpu_custom_call.1} parent=1 // pred_check_branch
      %15 = sbr.rel (0) target = $region13
    $region12: #{tpu_custom_call.1} parent=1 // pred_region
      _
    $region13: #{tpu_custom_call.1} parent=1 // pred_fallthru
      _
    // Predicated region
    $region14: #{tpu_custom_call.1} parent=1 // pred_check
      _
    $region15: #{tpu_custom_call.1} parent=1 // pred_check_branch
      %17 = sbr.rel (0) target = $region17
    $region16: #{tpu_custom_call.1} parent=1 // pred_region
      _
    $region17: #{tpu_custom_call.1} parent=1 // pred_fallthru
      _
    %v18 = vld [vmem:[%s0] sm:$0xff]
    %v19 = vld [vmem:[%s0 + $0x8] sm:$0xff]
    %v20 = vld [vmem:[%s0 + $0x10] sm:$0xff]
    %v21 = vld [vmem:[%s0 + $0x18] sm:$0xff]
    %26 = vst [vmem:[#allocation1] ss:$2 sm:$0xff] %v18
    %s27 = scalar_lea.vmem [#allocation1], 16
    %28 = vst [vmem:[%s27] ss:$2 sm:$0xff] %v19
    %v29 = vld.sshfl [vmem:[#allocation1] sm:$0xff pattern:$0x75316420]
    %v30 = vld.sshfl [vmem:[#allocation1 + $0x8] sm:$0xff pattern:$0x75316420]
    %v31 = vld.sshfl [vmem:[#allocation1 + $0x10] sm:$0xff pattern:$0x75316420]
    %v32 = vld.sshfl [vmem:[#allocation1 + $0x18] sm:$0xff pattern:$0x75316420]
    %s33 = scalar_lea.vmem [#allocation1], 32
    %34 = vst [vmem:[%s33] ss:$2 sm:$0xff] %v20
    %s35 = scalar_lea.vmem [#allocation1], 48
    %36 = vst [vmem:[%s35] ss:$2 sm:$0xff] %v21
    %v37 = vld.sshfl [vmem:[#allocation1 + $0x20] sm:$0xff pattern:$0x75316420]
    %v38 = vld.sshfl [vmem:[#allocation1 + $0x28] sm:$0xff pattern:$0x75316420]
    %v39 = vld.sshfl [vmem:[#allocation1 + $0x30] sm:$0xff pattern:$0x75316420]
    %v40 = vld.sshfl [vmem:[#allocation1 + $0x38] sm:$0xff pattern:$0x75316420]
    %vm49 = vcmask 1043456
    %v50 = vsel %vm49, %v29, 0.0
    %v51 = vrot.slane %v50, 4
    %v52 = vadd.f32 %v50, %v51
    %v53 = vrot.slane %v52, 2
    %v54 = vadd.f32 %v52, %v53
    %v55 = vrot.slane %v54, 1
    %v56 = vadd.f32 %v54, %v55
    %v57 = vsel %vm49, %v30, 0.0
    %v58 = vrot.slane %v57, 4
    %v59 = vadd.f32 %v57, %v58
    %v60 = vrot.slane %v59, 2
    %v61 = vadd.f32 %v59, %v60
    %v62 = vrot.slane %v61, 1
    %v63 = vadd.f32 %v61, %v62
    %v64 = vsel %vm49, %v31, 0.0
    %v65 = vrot.slane %v64, 4
    %v66 = vadd.f32 %v64, %v65
    %v67 = vrot.slane %v66, 2
    %v68 = vadd.f32 %v66, %v67
    %v69 = vrot.slane %v68, 1
    %v70 = vadd.f32 %v68, %v69
    %vm71 = vcmask 519168
    %v72 = vsel %vm71, %v32, 0.0
    %v73 = vrot.slane %v72, 4
    %v74 = vadd.f32 %v72, %v73
    %v75 = vrot.slane %v74, 2
    %v76 = vadd.f32 %v74, %v75
    %v77 = vrot.slane %v76, 1
    %v78 = vadd.f32 %v76, %v77
    %v79 = vsel %vm49, %v37, 0.0
    %v80 = vrot.slane %v79, 4
    %v81 = vadd.f32 %v79, %v80
    %v82 = vrot.slane %v81, 2
    %v83 = vadd.f32 %v81, %v82
    %v84 = vrot.slane %v83, 1
    %v85 = vadd.f32 %v83, %v84
    %v86 = vsel %vm49, %v38, 0.0
    %v87 = vrot.slane %v86, 4
    %v88 = vadd.f32 %v86, %v87
    %v89 = vrot.slane %v88, 2
    %v90 = vadd.f32 %v88, %v89
    %v91 = vrot.slane %v90, 1
    %v92 = vadd.f32 %v90, %v91
    %v93 = vsel %vm49, %v39, 0.0
    %v94 = vrot.slane %v93, 4
    %v95 = vadd.f32 %v93, %v94
    %v96 = vrot.slane %v95, 2
    %v97 = vadd.f32 %v95, %v96
    %v98 = vrot.slane %v97, 1
    %v99 = vadd.f32 %v97, %v98
    %v100 = vsel %vm71, %v40, 0.0
    %v101 = vrot.slane %v100, 4
    %v102 = vadd.f32 %v100, %v101
    %v103 = vrot.slane %v102, 2
    %v104 = vadd.f32 %v102, %v103
    %v105 = vrot.slane %v104, 1
    %v106 = vadd.f32 %v104, %v105
    %v107 = vld [vmem:[%s1] sm:$0xff]
    %v108 = vld [vmem:[%s1 + $0x8] sm:$0xff]
    %v109 = vld [vmem:[%s1 + $0x10] sm:$0xff]
    %v110 = vld [vmem:[%s1 + $0x18] sm:$0xff]
    %v111 = vld [vmem:[%s1 + $0x20] sm:$0xff]
    %v112 = vld [vmem:[%s1 + $0x28] sm:$0xff]
    %v113 = vld [vmem:[%s1 + $0x30] sm:$0xff]
    %v114 = vld [vmem:[%s1 + $0x38] sm:$0xff]
    %v115 = vld [vmem:[%s1 + $0x40] sm:$0xff]
    %v116 = vld [vmem:[%s1 + $0x48] sm:$0xff]
    %v117 = vld [vmem:[%s1 + $0x50] sm:$0xff]
    %v118 = vld [vmem:[%s1 + $0x58] sm:$0xff]
    %v119 = vld [vmem:[%s1 + $0x60] sm:$0xff]
    %v120 = vld [vmem:[%s1 + $0x68] sm:$0xff]
    %v121 = vld [vmem:[%s1 + $0x70] sm:$0xff]
    %v122 = vld [vmem:[%s1 + $0x78] sm:$0xff]
    %v123 = vld [vmem:[%s1 + $0x80] sm:$0xff]
    %v124 = vld [vmem:[%s1 + $0x88] sm:$0xff]
    %v125 = vld [vmem:[%s1 + $0x90] sm:$0xff]
    %v126 = vld [vmem:[%s1 + $0x98] sm:$0xff]
    %v127 = vld [vmem:[%s1 + $0xa0] sm:$0xff]
    %v128 = vld [vmem:[%s1 + $0xa8] sm:$0xff]
    %v129 = vld [vmem:[%s1 + $0xb0] sm:$0xff]
    %v130 = vld [vmem:[%s1 + $0xb8] sm:$0xff]
    %v131 = vld [vmem:[%s1 + $0xc0] sm:$0xff]
    %v132 = vld [vmem:[%s1 + $0xc8] sm:$0xff]
    %v133 = vld [vmem:[%s1 + $0xd0] sm:$0xff]
    %v134 = vld [vmem:[%s1 + $0xd8] sm:$0xff]
    %v135 = vld [vmem:[%s1 + $0xe0] sm:$0xff]
    %v136 = vld [vmem:[%s1 + $0xe8] sm:$0xff]
    %v137 = vld [vmem:[%s1 + $0xf0] sm:$0xff]
    %v138 = vld [vmem:[%s1 + $0xf8] sm:$0xff]
    %v139 = vld [vmem:[%s1 + $0x100] sm:$0xff]
    %v140 = vld [vmem:[%s1 + $0x108] sm:$0xff]
    %v141 = vld [vmem:[%s1 + $0x110] sm:$0xff]
    %v142 = vld [vmem:[%s1 + $0x118] sm:$0xff]
    %v143 = vld [vmem:[%s1 + $0x120] sm:$0xff]
    %v144 = vld [vmem:[%s1 + $0x128] sm:$0xff]
    %v145 = vld [vmem:[%s1 + $0x130] sm:$0xff]
    %v146 = vld [vmem:[%s1 + $0x138] sm:$0xff]
    %v147 = vld [vmem:[%s1 + $0x140] sm:$0xff]
    %v148 = vld [vmem:[%s1 + $0x148] sm:$0xff]
    %v149 = vld [vmem:[%s1 + $0x150] sm:$0xff]
    %v150 = vld [vmem:[%s1 + $0x158] sm:$0xff]
    %v151 = vld [vmem:[%s1 + $0x160] sm:$0xff]
    %v152 = vld [vmem:[%s1 + $0x168] sm:$0xff]
    %v153 = vld [vmem:[%s1 + $0x170] sm:$0xff]
    %v154 = vld [vmem:[%s1 + $0x178] sm:$0xff]
    %v155 = vld [vmem:[%s1 + $0x180] sm:$0xff]
    %v156 = vld [vmem:[%s1 + $0x188] sm:$0xff]
    %v157 = vld [vmem:[%s1 + $0x190] sm:$0xff]
    %v158 = vld [vmem:[%s1 + $0x198] sm:$0xff]
    %v159 = vld [vmem:[%s1 + $0x1a0] sm:$0xff]
    %v160 = vld [vmem:[%s1 + $0x1a8] sm:$0xff]
    %v161 = vld [vmem:[%s1 + $0x1b0] sm:$0xff]
    %v162 = vld [vmem:[%s1 + $0x1b8] sm:$0xff]
    %v163 = vld [vmem:[%s2] sm:$0x1]
    %v165 = vperm.slane %v163, 0
    %vm175 = vcmask 1041409
    %v176 = vsel %vm175, %v85, %v56
    %v177 = vsel %vm175, %v92, %v63
    %v178 = vsel %vm175, %v99, %v70
    %v179 = vsel %vm175, %v106, %v78
    %vm183 = vcmask 523264
    %v184 = vsel %vm183, %v179, 0
    %186 = vmatpush.msra.mxu0 %v122
    %187 = vmatpush.msra.mxu0 %v121
    %188 = vmatpush.msra.mxu0 %v120
    %189 = vmatpush.msra.mxu0 %v119
    %190 = vmatpush.msra.mxu0 %v118
    %191 = vmatpush.msra.mxu0 %v117
    %192 = vmatpush.msra.mxu0 %v116
    %193 = vmatpush.msra.mxu0 %v115
    %194 = vmatpush.msra.mxu0 %v114
    %195 = vmatpush.msra.mxu0 %v113
    %196 = vmatpush.msra.mxu0 %v112
    %197 = vmatpush.msra.mxu0 %v111
    %198 = vmatpush.msra.mxu0 %v110
    %199 = vmatpush.msra.mxu0 %v109
    %200 = vmatpush.msra.mxu0 %v108
    %201 = vmatpush.msra.mxu0 %v107
    %202 = vmatmul.f32.gmra.mxu0 %v176
    %v203 = vpop.f32.mrf.mxu0
    %v204 = vadd.f32 %v165, %v203
    %205 = vdwg.mxu0
    %206 = vmatpush.msra.mxu0 %v138
    %207 = vmatpush.msra.mxu0 %v137
    %208 = vmatpush.msra.mxu0 %v136
    %209 = vmatpush.msra.mxu0 %v135
    %210 = vmatpush.msra.mxu0 %v134
    %211 = vmatpush.msra.mxu0 %v133
    %212 = vmatpush.msra.mxu0 %v132
    %213 = vmatpush.msra.mxu0 %v131
    %214 = vmatpush.msra.mxu0 %v130
    %215 = vmatpush.msra.mxu0 %v129
    %216 = vmatpush.msra.mxu0 %v128
    %217 = vmatpush.msra.mxu0 %v127
    %218 = vmatpush.msra.mxu0 %v126
    %219 = vmatpush.msra.mxu0 %v125
    %220 = vmatpush.msra.mxu0 %v124
    %221 = vmatpush.msra.mxu0 %v123
    %222 = vmatmul.f32.gmra.mxu0 %v177
    %v223 = vpop.f32.mrf.mxu0
    %v224 = vadd.f32 %v204, %v223
    %225 = vdwg.mxu0
    %226 = vmatpush.msra.mxu0 %v154
    %227 = vmatpush.msra.mxu0 %v153
    %228 = vmatpush.msra.mxu0 %v152
    %229 = vmatpush.msra.mxu0 %v151
    %230 = vmatpush.msra.mxu0 %v150
    %231 = vmatpush.msra.mxu0 %v149
    %232 = vmatpush.msra.mxu0 %v148
    %233 = vmatpush.msra.mxu0 %v147
    %234 = vmatpush.msra.mxu0 %v146
    %235 = vmatpush.msra.mxu0 %v145
    %236 = vmatpush.msra.mxu0 %v144
    %237 = vmatpush.msra.mxu0 %v143
    %238 = vmatpush.msra.mxu0 %v142
    %239 = vmatpush.msra.mxu0 %v141
    %240 = vmatpush.msra.mxu0 %v140
    %241 = vmatpush.msra.mxu0 %v139
    %242 = vmatmul.f32.gmra.mxu0 %v178
    %v243 = vpop.f32.mrf.mxu0
    %v244 = vadd.f32 %v224, %v243
    %245 = vdwg.mxu0
    %246 = vmatpush.msra.mxu0 0.0
    %247 = vmatpush.msra.mxu0 0.0
    %248 = vmatpush.msra.mxu0 0.0
    %249 = vmatpush.msra.mxu0 0.0
    %250 = vmatpush.msra.mxu0 0.0
    %251 = vmatpush.msra.mxu0 0.0
    %252 = vmatpush.msra.mxu0 0.0
    %253 = vmatpush.msra.mxu0 0.0
    %254 = vmatpush.msra.mxu0 %v162
    %255 = vmatpush.msra.mxu0 %v161
    %256 = vmatpush.msra.mxu0 %v160
    %257 = vmatpush.msra.mxu0 %v159
    %258 = vmatpush.msra.mxu0 %v158
    %259 = vmatpush.msra.mxu0 %v157
    %260 = vmatpush.msra.mxu0 %v156
    %261 = vmatpush.msra.mxu0 %v155
    %262 = vmatmul.f32.gmra.mxu0 %v184
    %v263 = vpop.f32.mrf.mxu0
    %v264 = vadd.f32 %v244, %v263
    %265 = vdwg.mxu0
    %v266 = vxor.u32 %v264, 2147483648
    %v267 = vmul.f32 %v266, 1.442695
    %v268 = vpow.pop %v267
    %v269 = vadd.f32 %v268, 1.0
    %v270 = vrcp.pop %v269
    %v271 = vmul.f32 %v269, %v270
    %v272 = vsub.f32 1.0, %v271
    %v273 = vmul.f32 %v270, %v272
    %v274 = vadd.f32 %v270, %v273
    %vm275 = vweird.f32 %v269
    %vm276 = vweird.f32 %v270
    %vm277 = vmor %vm275, %vm276
    %v278 = vsel %vm277, %v270, %v274
    %v279 = vand.u32 2147483647, %v269
    %vm280 = vcmp.eq.f32.partialorder %v279, 8.507059e+37
    %v281 = vand.u32 %v269, 2147483648
    %v282 = vor.u32 1.1754944e-38, %v281
    %v283 = vsel %vm280, %v282, %v278
    %v284 = vmul.f32 1.0, %v283
    %v285 = vld [vmem:[%s3] sm:$0xff]
    %v286 = vld [vmem:[%s3 + $0x8] sm:$0xff]
    %v287 = vld [vmem:[%s3 + $0x10] sm:$0xff]
    %v288 = vld [vmem:[%s3 + $0x18] sm:$0xff]
    %v289 = vld [vmem:[%s3 + $0x20] sm:$0xff]
    %v290 = vld [vmem:[%s3 + $0x28] sm:$0xff]
    %v291 = vld [vmem:[%s3 + $0x30] sm:$0xff]
    %v292 = vld [vmem:[%s3 + $0x38] sm:$0xff]
    %v293 = vld [vmem:[%s3 + $0x40] sm:$0xff]
    %v294 = vld [vmem:[%s3 + $0x48] sm:$0xff]
    %v295 = vld [vmem:[%s3 + $0x50] sm:$0xff]
    %v296 = vld [vmem:[%s3 + $0x58] sm:$0xff]
    %v297 = vld [vmem:[%s3 + $0x60] sm:$0x3f]
    %v298 = vld [vmem:[%s3 + $0x68] sm:$0x3f]
    %v299 = vld [vmem:[%s3 + $0x70] sm:$0x3f]
    %v300 = vld [vmem:[%s3 + $0x78] sm:$0x3f]
    %vm301 = vcmask 244736
    %v303 = vsel %vm301, %v284, 0
    %vm305 = vcmask 1045504
    %v307 = vsel %vm305, %v297, 0
    %v310 = vsel %vm305, %v298, 0
    %v313 = vsel %vm305, %v299, 0
    %v316 = vsel %vm305, %v300, 0
    %318 = vmatpush.msra.mxu0 0.0
    %319 = vmatpush.msra.mxu0 0.0
    %320 = vmatpush.msra.mxu0 0.0
    %321 = vmatpush.msra.mxu0 0.0
    %322 = vmatpush.msra.mxu0 0.0
    %323 = vmatpush.msra.mxu0 0.0
    %324 = vmatpush.msra.mxu0 0.0
    %325 = vmatpush.msra.mxu0 0.0
    %326 = vmatpush.msra.mxu0 0.0
    %327 = vmatpush.msra.mxu0 0.0
    %328 = vmatpush.msra.mxu0 0.0
    %329 = vmatpush.msra.mxu0 0.0
    %330 = vmatpush.msra.mxu0 %v307
    %331 = vmatpush.msra.mxu0 %v293
    %332 = vmatpush.msra.mxu0 %v289
    %333 = vmatpush.msra.mxu0 %v285
    %334 = vmatmul.f32.gmra.mxu0 %v303
    %v335 = vpop.f32.mrf.mxu0
    %v336 = vadd.f32 0.0, %v335
    %337 = vdwg.mxu0
    %338 = vmatpush.msra.mxu0 0.0
    %339 = vmatpush.msra.mxu0 0.0
    %340 = vmatpush.msra.mxu0 0.0
    %341 = vmatpush.msra.mxu0 0.0
    %342 = vmatpush.msra.mxu0 0.0
    %343 = vmatpush.msra.mxu0 0.0
    %344 = vmatpush.msra.mxu0 0.0
    %345 = vmatpush.msra.mxu0 0.0
    %346 = vmatpush.msra.mxu0 0.0
    %347 = vmatpush.msra.mxu0 0.0
    %348 = vmatpush.msra.mxu0 0.0
    %349 = vmatpush.msra.mxu0 0.0
    %350 = vmatpush.msra.mxu0 %v310
    %351 = vmatpush.msra.mxu0 %v294
    %352 = vmatpush.msra.mxu0 %v290
    %353 = vmatpush.msra.mxu0 %v286
    %354 = vmatmul.f32.gmra.mxu0 %v303
    %v355 = vpop.f32.mrf.mxu0
    %v356 = vadd.f32 0.0, %v355
    %357 = vdwg.mxu0
    %358 = vmatpush.msra.mxu0 0.0
    %359 = vmatpush.msra.mxu0 0.0
    %360 = vmatpush.msra.mxu0 0.0
    %361 = vmatpush.msra.mxu0 0.0
    %362 = vmatpush.msra.mxu0 0.0
    %363 = vmatpush.msra.mxu0 0.0
    %364 = vmatpush.msra.mxu0 0.0
    %365 = vmatpush.msra.mxu0 0.0
    %366 = vmatpush.msra.mxu0 0.0
    %367 = vmatpush.msra.mxu0 0.0
    %368 = vmatpush.msra.mxu0 0.0
    %369 = vmatpush.msra.mxu0 0.0
    %370 = vmatpush.msra.mxu0 %v313
    %371 = vmatpush.msra.mxu0 %v295
    %372 = vmatpush.msra.mxu0 %v291
    %373 = vmatpush.msra.mxu0 %v287
    %374 = vmatmul.f32.gmra.mxu0 %v303
    %v375 = vpop.f32.mrf.mxu0
    %v376 = vadd.f32 0.0, %v375
    %377 = vdwg.mxu0
    %378 = vmatpush.msra.mxu0 0.0
    %379 = vmatpush.msra.mxu0 0.0
    %380 = vmatpush.msra.mxu0 0.0
    %381 = vmatpush.msra.mxu0 0.0
    %382 = vmatpush.msra.mxu0 0.0
    %383 = vmatpush.msra.mxu0 0.0
    %384 = vmatpush.msra.mxu0 0.0
    %385 = vmatpush.msra.mxu0 0.0
    %386 = vmatpush.msra.mxu0 0.0
    %387 = vmatpush.msra.mxu0 0.0
    %388 = vmatpush.msra.mxu0 0.0
    %389 = vmatpush.msra.mxu0 0.0
    %390 = vmatpush.msra.mxu0 %v316
    %391 = vmatpush.msra.mxu0 %v296
    %392 = vmatpush.msra.mxu0 %v292
    %393 = vmatpush.msra.mxu0 %v288
    %394 = vmatmul.f32.gmra.mxu0 %v303
    %v395 = vpop.f32.mrf.mxu0
    %v396 = vadd.f32 0.0, %v395
    %397 = vdwg.mxu0
    %v402 = vrot.slane %v356, 7
    %v403 = vrot.slane %v376, 6
    %v404 = vrot.slane %v396, 5
    %vm405 = vcmask 1040384
    %v406 = vsel %vm405, %v336, %v402
    %vm407 = vcmask 1042434
    %v408 = vsel %vm407, %v403, %v404
    %vm409 = vcmask 1041408
    %v410 = vsel %vm409, %v406, %v408
    %v411 = vsel %vm175, %v336, %v402
    %vm412 = vcmask 1043459
    %v413 = vsel %vm412, %v403, %v404
    %vm414 = vcmask 1042433
    %v415 = vsel %vm414, %v411, %v413
    %v416 = vrot.slane %v415, 1
    %v417 = vperm.slane %v410, 0
    %v418 = vperm.slane %v410, 1
    %v419 = vperm.slane %v410, 2
    %v420 = vperm.slane %v410, 3
    %v421 = vperm.slane %v416, 0
    %v422 = vperm.slane %v416, 1
    %v423 = vperm.slane %v416, 2
    %v424 = vperm.slane %v416, 3
    %v425 = vrot.slane %v418, 4
    %v426 = vrot.slane %v420, 4
    %v427 = vrot.slane %v422, 4
    %v428 = vrot.slane %v424, 4
    %v429 = vsel %vm49, %v417, %v425
    %v430 = vsel %vm49, %v419, %v426
    %v431 = vsel %vm49, %v421, %v427
    %v432 = vsel %vm49, %v423, %v428
    %v437 = vmul.f32 %v18, %v429
    %v438 = vmul.f32 %v19, %v430
    %v439 = vmul.f32 %v20, %v431
    %v440 = vmul.f32 %v21, %v432
    %441 = vst [vmem:[#allocation2] sm:$0xff] %v437
    %vm442 = vcmask 523268
    %vm443 = vmor %vm442, %vm49
    %444 = vst.msk [vmem:[#allocation2 + $0x8] sm:$0xff] %vm443, %v438
    %445 = vst [vmem:[#allocation2 + $0x10] sm:$0xff] %v439
    %446 = vst.msk [vmem:[#allocation2 + $0x18] sm:$0xff] %vm443, %v440
    // Predicated region
    $region18: #{tpu_custom_call.1} parent=1 // pred_check
      _
    $region19: #{tpu_custom_call.1} parent=1 // pred_check_branch
      %448 = sbr.rel (0) target = $region21
    $region20: #{tpu_custom_call.1} parent=1 // pred_region
      %450 = vsyncadd [#allocation3], 0
      %s451 = sshll.u32 [#allocation2], 4
      %s452 = int_to_ptr.vmem [resolvable:$true] %s451
      %s453 = sshll.u32 %s4, 4
      %s454 = int_to_ptr.hbm [resolvable:$true] %s453
      %459 = dma.vmem_to_hbm [thread:$0]  %s452, 512, %s454, [#allocation3], 256, 256, 16
    $region21: #{tpu_custom_call.1} parent=1 // pred_fallthru
      _
    // Predicated region
    $region22: #{tpu_custom_call.1} parent=1 // pred_check
      _
    $region23: #{tpu_custom_call.1} parent=1 // pred_check_branch
      %461 = sbr.rel (0) target = $region25
    $region24: #{tpu_custom_call.1} parent=1 // pred_region
      %463 = dma.done [#allocation3], 512
    $region25: #{tpu_custom_call.1} parent=1 // pred_fallthru
      _
    %464 = vsyncpa [#allocation3], 1

</llo_original>
